<compile_context>
chip_gen: v7x
topology: tpu7x:2x2x1
jax: 0.10.0
libtpu: 0.0.40
codegen_flags: <defaults>
</compile_context>

<pallas_src>
import jax
import jax.numpy as jnp
from jax.experimental import pallas as pl
from jax.experimental.pallas import tpu as pltpu

D_IN = 32     # input feature dim (scaler operates on this axis)
HIDDEN = 32   # hidden width of the wrapped net
D_OUT = 9     # raw net output dim
D_KEEP = D_OUT - 1   # module returns D_OUT - 1 features

TILE_B_MAX = 1024    # batch rows per grid step (128 KiB/input buffer -> safe on v5e/v6e/v7x)


def _mlp_discard_kernel(x_ref, w1_ref, b1_ref, w2_ref, b2_ref, o_ref):
    # x_ref: (TILE_B, D_IN)   w1: (D_IN, HIDDEN)  b1: (1, HIDDEN)
    # w2: (HIDDEN, D_KEEP)    b2: (1, D_KEEP)     o_ref: (TILE_B, D_KEEP)
    x = x_ref[...].astype(jnp.float32)   # cast-on-load; hides under DMA
    h = jnp.dot(x, w1_ref[...], preferred_element_type=jnp.float32) + b1_ref[...]
    h = jnp.maximum(h, 0.0)
    y = jnp.dot(h, w2_ref[...], preferred_element_type=jnp.float32) + b2_ref[...]
    o_ref[...] = y.astype(o_ref.dtype)


def _run_kernel(x2d, w1, b1, w2, b2):
    """x2d: (B, D_IN) any float dtype. Returns (B, D_KEEP) float32."""
    B = x2d.shape[0]
    # tile: multiple of 8 (sublane), capped so double-buffered tiles stay tiny
    tile_b = min(TILE_B_MAX, max(8, -(-B // 8) * 8))
    Bp = -(-B // tile_b) * tile_b
    if Bp != B:
        x2d = jnp.pad(x2d, ((0, Bp - B), (0, 0)))

    out = pl.pallas_call(
        _mlp_discard_kernel,
        out_shape=jax.ShapeDtypeStruct((Bp, D_KEEP), jnp.float32),
        grid_spec=pltpu.PrefetchScalarGridSpec(
            num_scalar_prefetch=0,
            grid=(Bp // tile_b,),
            in_specs=[
                pl.BlockSpec((tile_b, D_IN), lambda i: (i, 0)),      # x: streamed
                pl.BlockSpec((D_IN, HIDDEN), lambda i: (0, 0)),      # w1: resident
                pl.BlockSpec((1, HIDDEN), lambda i: (0, 0)),         # b1: resident
                pl.BlockSpec((HIDDEN, D_KEEP), lambda i: (0, 0)),    # w2: resident
                pl.BlockSpec((1, D_KEEP), lambda i: (0, 0)),         # b2: resident
            ],
            out_specs=pl.BlockSpec((tile_b, D_KEEP), lambda i: (i, 0)),
        ),
        compiler_params=pltpu.CompilerParams(
            dimension_semantics=("parallel",)),
    )(x2d, w1, b1, w2, b2)
    return out[:B]


def rescale_and_discard_last_output(x, params):
    """Forward pass for 1D/2D/3D inputs: (x - mean)/scale -> MLP -> [..., :-1]."""
    mean, scale, w1, b1, w2, b2 = params

    # Fold the StandardScaler into the first linear layer (exact algebra,
    # done once on tiny (32,)-sized arrays, outside the hot path):
    #   ((x - mean)/scale) @ W1 + b1 == x @ (W1 / scale[:,None]) + (b1 - (mean/scale) @ W1)
    inv_scale = 1.0 / scale                       # (1, D_IN)
    w1f = w1 * inv_scale.reshape(D_IN, 1)         # (D_IN, HIDDEN)
    b1f = b1 - (mean * inv_scale) @ w1            # (1, HIDDEN)

    # Discard the last output column at the weight level so the kernel never
    # computes it and the wrapper never re-slices the output through HBM.
    w2t = w2[:, :D_KEEP]                          # (HIDDEN, D_KEEP)
    b2t = b2[:, :D_KEEP]                          # (1, D_KEEP)

    orig_shape = x.shape
    assert orig_shape[-1] == D_IN
    x2d = x.reshape(-1, D_IN)                     # flatten leading dims (rank 1/2/3)
    y2d = _run_kernel(x2d, w1f, b1f, w2t, b2t)
    return y2d.reshape(orig_shape[:-1] + (D_KEEP,))


def make_params():
    """Deterministic scaler statistics and MLP weights."""
    k = jax.random.PRNGKey(42)
    k1, k2, k3, k4 = jax.random.split(k, 4)
    # Scaler: StandardScaler-style mean_ / scale_ (scale_ strictly positive).
    mean = (0.1 * jnp.arange(D_IN, dtype=jnp.float32)).reshape(1, D_IN)
    scale = (1.0 + 0.05 * jnp.arange(D_IN, dtype=jnp.float32)).reshape(1, D_IN)
    # nn.Linear weights are (out, in); store them transposed so the kernel
    # computes x @ W directly.
    w1 = (jax.random.normal(k1, (HIDDEN, D_IN), jnp.float32) * 0.1).T
    b1 = (jax.random.normal(k2, (HIDDEN,), jnp.float32) * 0.1).reshape(1, HIDDEN)
    w2 = (jax.random.normal(k3, (D_OUT, HIDDEN), jnp.float32) * 0.1).T
    b2 = (jax.random.normal(k4, (D_OUT,), jnp.float32) * 0.1).reshape(1, D_OUT)
    return (mean, scale, w1, b1, w2, b2)


def _reference(x, params):
    """Strict (un-folded) pure-JAX reference."""
    mean, scale, w1, b1, w2, b2 = params
    xs = (x.astype(jnp.float32) - mean.reshape(-1)) / scale.reshape(-1)
    h = jnp.maximum(xs @ w1 + b1.reshape(-1), 0.0)
    y = h @ w2 + b2.reshape(-1)
    return y[..., 0:-1]


if __name__ == "__main__":
    params = make_params()
    key = jax.random.PRNGKey(0)
    k3d, k2d, k1d, kbig = jax.random.split(key, 4)

    # 3D case: (batch=2, seq=8, features=32) -> output (2, 8, 8)
    x3 = jax.random.normal(k3d, (2, 8, D_IN), jnp.float32)
    y3 = jax.block_until_ready(rescale_and_discard_last_output(x3, params))
    assert y3.shape == (2, 8, D_KEEP), y3.shape

    # 2D case: (batch=8, features=32) -> output (8, 8)
    x2 = jax.random.normal(k2d, (8, D_IN), jnp.float32)
    y2 = jax.block_until_ready(rescale_and_discard_last_output(x2, params))
    assert y2.shape == (8, D_KEEP), y2.shape

    # 1D case: (features=32,) -> output (8,)
    x1 = jax.random.normal(k1d, (D_IN,), jnp.float32)
    y1 = jax.block_until_ready(rescale_and_discard_last_output(x1, params))
    assert y1.shape == (D_KEEP,), y1.shape

    # larger 2D case with a ragged batch to exercise multi-step grid + padding
    xb = jax.random.normal(kbig, (2051, D_IN), jnp.float32)
    yb = jax.block_until_ready(rescale_and_discard_last_output(xb, params))
    assert yb.shape == (2051, D_KEEP), yb.shape

    # numerical checks against strict pure-JAX reference
    assert jnp.allclose(y3, _reference(x3, params), atol=1e-5, rtol=1e-5)
    assert jnp.allclose(y2, _reference(x2, params), atol=1e-5, rtol=1e-5)
    assert jnp.allclose(y1, _reference(x1, params), atol=1e-5, rtol=1e-5)
    assert jnp.allclose(yb, _reference(xb, params), atol=1e-5, rtol=1e-5)

    print("KERNEL_OK")
</pallas_src>

<mosaic_0001>
module attributes {stable_mosaic.version = 11 : i64} {
  func.func @_mlp_discard_kernel(%arg0: i32, %arg1: memref<16x32xf32, #tpu.memory_space<vmem>>, %arg2: memref<32x32xf32, #tpu.memory_space<vmem>>, %arg3: memref<1x32xf32, #tpu.memory_space<vmem>>, %arg4: memref<32x8xf32, #tpu.memory_space<vmem>>, %arg5: memref<1x8xf32, #tpu.memory_space<vmem>>, %arg6: memref<16x8xf32, #tpu.memory_space<vmem>>) attributes {dimension_semantics = [#tpu.dimension_semantics<parallel>], iteration_bounds = array<i64: 1>, scalar_prefetch = 0 : i64, scratch_operands = 0 : i64, tpu.core_type = #tpu.core_type<tc>, window_params = [{transform_indices = @transform_0, window_bounds = array<i64: 16, 32>}, {pipeline_mode = #tpu.pipeline_mode<synchronous>, transform_indices = @transform_1, window_bounds = array<i64: 32, 32>}, {pipeline_mode = #tpu.pipeline_mode<synchronous>, transform_indices = @transform_2, window_bounds = array<i64: 1, 32>}, {pipeline_mode = #tpu.pipeline_mode<synchronous>, transform_indices = @transform_3, window_bounds = array<i64: 32, 8>}, {pipeline_mode = #tpu.pipeline_mode<synchronous>, transform_indices = @transform_4, window_bounds = array<i64: 1, 8>}, {transform_indices = @transform_5, window_bounds = array<i64: 16, 8>}]} {
    %c0 = arith.constant 0 : index
    %c0_0 = arith.constant 0 : index
    %0 = vector.load %arg1[%c0, %c0_0] : memref<16x32xf32, #tpu.memory_space<vmem>>, vector<16x32xf32>
    %c0_1 = arith.constant 0 : index
    %c0_2 = arith.constant 0 : index
    %1 = vector.load %arg2[%c0_1, %c0_2] : memref<32x32xf32, #tpu.memory_space<vmem>>, vector<32x32xf32>
    %cst = arith.constant dense<0.000000e+00> : vector<16x32xf32>
    %2 = tpu.matmul %0, %1, %cst {dimension_numbers = #tpu.dot_dimension_numbers<[1], [0], [0], [1], [0, 0, 1, 1], [], []>} : vector<16x32xf32>, vector<32x32xf32>, vector<16x32xf32> -> vector<16x32xf32>
    %c0_3 = arith.constant 0 : index
    %c0_4 = arith.constant 0 : index
    %3 = vector.load %arg3[%c0_3, %c0_4] : memref<1x32xf32, #tpu.memory_space<vmem>>, vector<1x32xf32>
    %4 = vector.broadcast %3 : vector<1x32xf32> to vector<16x32xf32>
    %5 = arith.addf %2, %4 : vector<16x32xf32>
    %cst_5 = arith.constant 0.000000e+00 : f32
    %6 = vector.broadcast %cst_5 : f32 to vector<16x32xf32>
    %7 = arith.maximumf %5, %6 : vector<16x32xf32>
    %c0_6 = arith.constant 0 : index
    %c0_7 = arith.constant 0 : index
    %8 = vector.load %arg4[%c0_6, %c0_7] : memref<32x8xf32, #tpu.memory_space<vmem>>, vector<32x8xf32>
    %cst_8 = arith.constant dense<0.000000e+00> : vector<16x8xf32>
    %9 = tpu.matmul %7, %8, %cst_8 {dimension_numbers = #tpu.dot_dimension_numbers<[1], [0], [0], [1], [0, 0, 1, 1], [], []>} : vector<16x32xf32>, vector<32x8xf32>, vector<16x8xf32> -> vector<16x8xf32>
    %c0_9 = arith.constant 0 : index
    %c0_10 = arith.constant 0 : index
    %10 = vector.load %arg5[%c0_9, %c0_10] : memref<1x8xf32, #tpu.memory_space<vmem>>, vector<1x8xf32>
    %11 = vector.broadcast %10 : vector<1x8xf32> to vector<16x8xf32>
    %12 = arith.addf %9, %11 : vector<16x8xf32>
    %c0_11 = arith.constant 0 : index
    %c0_12 = arith.constant 0 : index
    %13 = vector.load %arg6[%c0_11, %c0_12] : memref<16x8xf32, #tpu.memory_space<vmem>>, vector<16x8xf32>
    tpu.vector_store %arg6[%c0_11, %c0_12], %12 {strides = array<i32>} : memref<16x8xf32, #tpu.memory_space<vmem>>, vector<16x8xf32>,
    return
  }
  func.func @transform_0(%arg0: i32) -> (i32, i32) {
    %c0_i32 = arith.constant 0 : i32
    %c0_i32_0 = arith.constant 0 : i32
    return %arg0, %c0_i32 : i32, i32
  }
  func.func @transform_1(%arg0: i32) -> (i32, i32) {
    %c0_i32 = arith.constant 0 : i32
    %c0_i32_0 = arith.constant 0 : i32
    %c0_i32_1 = arith.constant 0 : i32
    return %c0_i32, %c0_i32_0 : i32, i32
  }
  func.func @transform_2(%arg0: i32) -> (i32, i32) {
    %c0_i32 = arith.constant 0 : i32
    %c0_i32_0 = arith.constant 0 : i32
    %c0_i32_1 = arith.constant 0 : i32
    return %c0_i32, %c0_i32_0 : i32, i32
  }
  func.func @transform_3(%arg0: i32) -> (i32, i32) {
    %c0_i32 = arith.constant 0 : i32
    %c0_i32_0 = arith.constant 0 : i32
    %c0_i32_1 = arith.constant 0 : i32
    return %c0_i32, %c0_i32_0 : i32, i32
  }
  func.func @transform_4(%arg0: i32) -> (i32, i32) {
    %c0_i32 = arith.constant 0 : i32
    %c0_i32_0 = arith.constant 0 : i32
    %c0_i32_1 = arith.constant 0 : i32
    return %c0_i32, %c0_i32_0 : i32, i32
  }
  func.func @transform_5(%arg0: i32) -> (i32, i32) {
    %c0_i32 = arith.constant 0 : i32
    %c0_i32_0 = arith.constant 0 : i32
    return %arg0, %c0_i32 : i32, i32
  }
}

</mosaic_0001>

<llo_original>
// kernel: tpu_custom_call.1
$region0: #{tpu_custom_call.1}
  #allocation0 [shape = 'u32[]', space=smem, size = 0x4, offset = 0x4, fixed_abs, tag = 'smem constant byte address 0x4 - core index']
  #allocation1 [shape = 'u32[144,128]{1,0:T(1,128)}', space=vmem, size = 0x12000, scoped, tag = 'internal scratch']
  %s0 = inlined_call_operand.hbm [shape: f32[16,32], index: 0, kind: input, shape index: {}]
  %s1 = inlined_call_operand.vmem [shape: f32[32,32], index: 1, kind: input, shape index: {}]
  %s2 = inlined_call_operand.vmem [shape: f32[1,32], index: 2, kind: input, shape index: {}]
  %s3 = inlined_call_operand.vmem [shape: f32[32,8], index: 3, kind: input, shape index: {}]
  %s4 = inlined_call_operand.vmem [shape: f32[1,8], index: 4, kind: input, shape index: {}]
  %s5 = inlined_call_operand.vmem [shape: f32[16,8], index: 5, kind: output, shape index: {}]
  %s6 = sld [smem:[#allocation0]]
  $region34: #{tpu_custom_call.1} parent=0
    _
  %s8 = ssub.s32 1, %s6
  %s9 = scalar_select 0, %s8, %s6
  $region1: #{tpu_custom_call.1} parent=0
    #allocation2 [shape = 'u8[8192]{0}', space=vmem, size = 0x2000, scoped, tag = 'input window, operand 0, single buffered']
    #allocation3 [shape = 's32[1]{0}', space=sflag, size = 0x4, scoped, tag = 'scoped memory for tpu_custom_call.1']
    %10 = vsyncpa [#allocation3], 0
    // Predicated region
    $region2: #{tpu_custom_call.1} parent=1 // pred_check
      _
    $region3: #{tpu_custom_call.1} parent=1 // pred_check_branch
      %12 = sbr.rel (0) target = $region5
    $region4: #{tpu_custom_call.1} parent=1 // pred_region
      %s14 = ssub.s32 256, 256
      %15 = vsyncadd [#allocation3], %s14
      %s16 = sshll.u32 [#allocation2], 4
      %s17 = int_to_ptr.vmem [resolvable:$true] %s16
      %22 = dma.hbm_to_vmem [thread:$0]  %s0, 256, %s17, [#allocation3], 128, 128, 8
    $region5: #{tpu_custom_call.1} parent=1 // pred_fallthru
      _
    // Predicated region
    $region6: #{tpu_custom_call.1} parent=1 // pred_check
      _
    $region7: #{tpu_custom_call.1} parent=1 // pred_check_branch
      %24 = sbr.rel (0) target = $region9
    $region8: #{tpu_custom_call.1} parent=1 // pred_region
      _
    $region9: #{tpu_custom_call.1} parent=1 // pred_fallthru
      _
    // Predicated region
    $region10: #{tpu_custom_call.1} parent=1 // pred_check
      _
    $region11: #{tpu_custom_call.1} parent=1 // pred_check_branch
      %26 = sbr.rel (0) target = $region13
    $region12: #{tpu_custom_call.1} parent=1 // pred_region
      _
    $region13: #{tpu_custom_call.1} parent=1 // pred_fallthru
      _
    // Predicated region
    $region14: #{tpu_custom_call.1} parent=1 // pred_check
      _
    $region15: #{tpu_custom_call.1} parent=1 // pred_check_branch
      %28 = sbr.rel (0) target = $region17
    $region16: #{tpu_custom_call.1} parent=1 // pred_region
      _
    $region17: #{tpu_custom_call.1} parent=1 // pred_fallthru
      _
    // Predicated region
    $region18: #{tpu_custom_call.1} parent=1 // pred_check
      _
    $region19: #{tpu_custom_call.1} parent=1 // pred_check_branch
      %30 = sbr.rel (0) target = $region21
    $region20: #{tpu_custom_call.1} parent=1 // pred_region
      _
    $region21: #{tpu_custom_call.1} parent=1 // pred_fallthru
      _
    // Predicated region
    $region22: #{tpu_custom_call.1} parent=1 // pred_check
      _
    $region23: #{tpu_custom_call.1} parent=1 // pred_check_branch
      %32 = sbr.rel (0) target = $region25
    $region24: #{tpu_custom_call.1} parent=1 // pred_region
      %33 = dma.done [#allocation3], 256
    $region25: #{tpu_custom_call.1} parent=1 // pred_fallthru
      _
    %v34 = vld [vmem:[#allocation2] sm:$0xff]
    %v35 = vld [vmem:[#allocation2 + $0x8] sm:$0xff]
    %v36 = vld [vmem:[%s1] sm:$0xff]
    %v37 = vld [vmem:[%s1 + $0x8] sm:$0xff]
    %v38 = vld [vmem:[%s1 + $0x10] sm:$0xff]
    %v39 = vld [vmem:[%s1 + $0x18] sm:$0xff]
    %v40 = vld [vmem:[%s2] sm:$0x1]
    %v42 = vlaneseq
    %v43 = vshrl.u32 %v42, 7
    %v44 = vsub.s32 0, %v43
    %v45 = vrot.slane %v40, %v44
    %vm47 = vcmask 261120
    %v49 = vsel %vm47, %v34, 0
    %v52 = vsel %vm47, %v35, 0
    %54 = vmatprep.subr.mxu0 0.0
    %55 = vmatpush1.msra.mxu0 %v36
    %56 = vmatprep.subr.mxu0 0.0
    %57 = vmatpush1.msra.mxu0 %v37
    %58 = vmatprep.subr.mxu0 0.0
    %59 = vmatpush1.msra.mxu0 %v38
    %60 = vmatprep.subr.mxu0 0.0
    %61 = vmatpush1.msra.mxu0 %v39
    %62 = vmatprep.subr.mxu0 0.0
    %63 = vmatpush1.msra.mxu0 0.0
    %64 = vmatprep.subr.mxu0 0.0
    %65 = vmatpush1.msra.mxu0 0.0
    %66 = vmatprep.subr.mxu0 0.0
    %67 = vmatpush1.msra.mxu0 0.0
    %68 = vmatprep.subr.mxu0 0.0
    %69 = vmatpush1.msra.mxu0 0.0
    %70 = vmatprep.subr.mxu0 0.0
    %71 = vmatpush1.msra.mxu0 0.0
    %72 = vmatprep.subr.mxu0 0.0
    %73 = vmatpush1.msra.mxu0 0.0
    %74 = vmatprep.subr.mxu0 0.0
    %75 = vmatpush1.msra.mxu0 0.0
    %76 = vmatprep.subr.mxu0 0.0
    %77 = vmatpush1.msra.mxu0 0.0
    %78 = vmatprep.subr.mxu0 0.0
    %79 = vmatpush1.msra.mxu0 0.0
    %80 = vmatprep.subr.mxu0 0.0
    %81 = vmatpush1.msra.mxu0 0.0
    %82 = vmatprep.subr.mxu0 0.0
    %83 = vmatpush1.msra.mxu0 0.0
    %84 = vmatprep.subr.mxu0 0.0
    %85 = vmatpush1.msra.mxu0 0.0
    %86 = vmatprep.subr.mxu0 0.0
    %87 = vmatpush1.msra.mxu0 0.0
    %88 = vmatprep.subr.mxu0 0.0
    %89 = vmatpush1.msra.mxu0 0.0
    %90 = vmatprep.subr.mxu0 0.0
    %91 = vmatpush1.msra.mxu0 0.0
    %92 = vmatprep.subr.mxu0 0.0
    %93 = vmatpush1.msra.mxu0 0.0
    %94 = vmatprep.subr.mxu0 0.0
    %95 = vmatpush1.msra.mxu0 0.0
    %96 = vmatprep.subr.mxu0 0.0
    %97 = vmatpush1.msra.mxu0 0.0
    %98 = vmatprep.subr.mxu0 0.0
    %99 = vmatpush1.msra.mxu0 0.0
    %100 = vmatprep.subr.mxu0 0.0
    %101 = vmatpush1.msra.mxu0 0.0
    %102 = vmatprep.subr.mxu0 0.0
    %103 = vmatpush1.msra.mxu0 0.0
    %104 = vmatprep.subr.mxu0 0.0
    %105 = vmatpush1.msra.mxu0 0.0
    %106 = vmatprep.subr.mxu0 0.0
    %107 = vmatpush1.msra.mxu0 0.0
    %108 = vmatprep.subr.mxu0 0.0
    %109 = vmatpush1.msra.mxu0 0.0
    %110 = vmatprep.subr.mxu0 0.0
    %111 = vmatpush1.msra.mxu0 0.0
    %112 = vmatprep.subr.mxu0 0.0
    %113 = vmatpush1.msra.mxu0 0.0
    %114 = vmatprep.subr.mxu0 0.0
    %115 = vmatpush1.msra.mxu0 0.0
    %116 = vmatprep.subr.mxu0 0.0
    %117 = vmatpush1.msra.mxu0 0.0
    %118 = vmatprep.mubr.f32.mxu0 0.0
    %119 = vmatmul.mubr.f32.gmra.mrb[0].mxu0 %v49
    %v120 = vpop.f32.mrb[0].mxu0
    %v121 = vadd.f32 %v45, %v120
    %v122 = vpop.f32.mrb[0].mxu0
    %123 = vmatprep.mubr.f32.mxu0 0.0
    %124 = vmatmul.mubr.f32.gmra.mrb[0].mxu0 %v52
    %v125 = vpop.f32.mrb[0].mxu0
    %v126 = vadd.f32 %v45, %v125
    %v127 = vpop.f32.mrb[0].mxu0
    %128 = vdwg.mxu0
    %v129 = vmax.f32 %v121, 0.0
    %v130 = vmax.f32 %v126, 0.0
    %v131 = vld [vmem:[%s3] sm:$0xff]
    %v132 = vld [vmem:[%s3 + $0x8] sm:$0xff]
    %v133 = vld [vmem:[%s3 + $0x10] sm:$0xff]
    %v134 = vld [vmem:[%s3 + $0x18] sm:$0xff]
    %v135 = vld [vmem:[%s4] sm:$0x1]
    %v137 = vlaneseq
    %v138 = vshrl.u32 %v137, 7
    %v139 = vsub.s32 0, %v138
    %v140 = vrot.slane %v135, %v139
    %v143 = vsel %vm47, %v129, 0
    %v146 = vsel %vm47, %v130, 0
    %148 = vmatprep.subr.mxu0 0.0
    %149 = vmatpush1.msra.mxu0 %v131
    %150 = vmatprep.subr.mxu0 0.0
    %151 = vmatpush1.msra.mxu0 %v132
    %152 = vmatprep.subr.mxu0 0.0
    %153 = vmatpush1.msra.mxu0 %v133
    %154 = vmatprep.subr.mxu0 0.0
    %155 = vmatpush1.msra.mxu0 %v134
    %156 = vmatprep.subr.mxu0 0.0
    %157 = vmatpush1.msra.mxu0 0.0
    %158 = vmatprep.subr.mxu0 0.0
    %159 = vmatpush1.msra.mxu0 0.0
    %160 = vmatprep.subr.mxu0 0.0
    %161 = vmatpush1.msra.mxu0 0.0
    %162 = vmatprep.subr.mxu0 0.0
    %163 = vmatpush1.msra.mxu0 0.0
    %164 = vmatprep.subr.mxu0 0.0
    %165 = vmatpush1.msra.mxu0 0.0
    %166 = vmatprep.subr.mxu0 0.0
    %167 = vmatpush1.msra.mxu0 0.0
    %168 = vmatprep.subr.mxu0 0.0
    %169 = vmatpush1.msra.mxu0 0.0
    %170 = vmatprep.subr.mxu0 0.0
    %171 = vmatpush1.msra.mxu0 0.0
    %172 = vmatprep.subr.mxu0 0.0
    %173 = vmatpush1.msra.mxu0 0.0
    %174 = vmatprep.subr.mxu0 0.0
    %175 = vmatpush1.msra.mxu0 0.0
    %176 = vmatprep.subr.mxu0 0.0
    %177 = vmatpush1.msra.mxu0 0.0
    %178 = vmatprep.subr.mxu0 0.0
    %179 = vmatpush1.msra.mxu0 0.0
    %180 = vmatprep.subr.mxu0 0.0
    %181 = vmatpush1.msra.mxu0 0.0
    %182 = vmatprep.subr.mxu0 0.0
    %183 = vmatpush1.msra.mxu0 0.0
    %184 = vmatprep.subr.mxu0 0.0
    %185 = vmatpush1.msra.mxu0 0.0
    %186 = vmatprep.subr.mxu0 0.0
    %187 = vmatpush1.msra.mxu0 0.0
    %188 = vmatprep.subr.mxu0 0.0
    %189 = vmatpush1.msra.mxu0 0.0
    %190 = vmatprep.subr.mxu0 0.0
    %191 = vmatpush1.msra.mxu0 0.0
    %192 = vmatprep.subr.mxu0 0.0
    %193 = vmatpush1.msra.mxu0 0.0
    %194 = vmatprep.subr.mxu0 0.0
    %195 = vmatpush1.msra.mxu0 0.0
    %196 = vmatprep.subr.mxu0 0.0
    %197 = vmatpush1.msra.mxu0 0.0
    %198 = vmatprep.subr.mxu0 0.0
    %199 = vmatpush1.msra.mxu0 0.0
    %200 = vmatprep.subr.mxu0 0.0
    %201 = vmatpush1.msra.mxu0 0.0
    %202 = vmatprep.subr.mxu0 0.0
    %203 = vmatpush1.msra.mxu0 0.0
    %204 = vmatprep.subr.mxu0 0.0
    %205 = vmatpush1.msra.mxu0 0.0
    %206 = vmatprep.subr.mxu0 0.0
    %207 = vmatpush1.msra.mxu0 0.0
    %208 = vmatprep.subr.mxu0 0.0
    %209 = vmatpush1.msra.mxu0 0.0
    %210 = vmatprep.subr.mxu0 0.0
    %211 = vmatpush1.msra.mxu0 0.0
    %212 = vmatprep.mubr.f32.mxu0 0.0
    %213 = vmatmul.mubr.f32.gmra.mrb[0].mxu0 %v143
    %v214 = vpop.f32.mrb[0].mxu0
    %v215 = vadd.f32 %v140, %v214
    %v216 = vpop.f32.mrb[0].mxu0
    %217 = vmatprep.mubr.f32.mxu0 0.0
    %218 = vmatmul.mubr.f32.gmra.mrb[0].mxu0 %v146
    %v219 = vpop.f32.mrb[0].mxu0
    %v220 = vadd.f32 %v140, %v219
    %v221 = vpop.f32.mrb[0].mxu0
    %222 = vdwg.mxu0
    %vm223 = vcmask 64512
    %224 = vst.msk [vmem:[%s5] sm:$0xff] %vm223, %v215
    %225 = vst.msk [vmem:[%s5 + $0x8] sm:$0xff] %vm223, %v220
    // Predicated region
    $region26: #{tpu_custom_call.1} parent=1 // pred_check
      _
    $region27: #{tpu_custom_call.1} parent=1 // pred_check_branch
      %227 = sbr.rel (0) target = $region29
    $region28: #{tpu_custom_call.1} parent=1 // pred_region
      _
    $region29: #{tpu_custom_call.1} parent=1 // pred_fallthru
      _
    // Predicated region
    $region30: #{tpu_custom_call.1} parent=1 // pred_check
      _
    $region31: #{tpu_custom_call.1} parent=1 // pred_check_branch
      %229 = sbr.rel (0) target = $region33
    $region32: #{tpu_custom_call.1} parent=1 // pred_region
      _
    $region33: #{tpu_custom_call.1} parent=1 // pred_fallthru
      _
    %230 = vsyncpa [#allocation3], 1

</llo_original>
